<compile_context>
chip_gen: v5e
topology: v5e:2x2
jax: 0.10.0
libtpu: 0.0.40
codegen_flags: <defaults>
</compile_context>

<pallas_src>
import functools

import jax
import jax.numpy as jnp
from jax.experimental import pallas as pl
from jax.experimental.pallas import tpu as pltpu

LN_EPS = 1e-5  # nn.LayerNorm default


def _gap_head_kernel(x_ref, w_ref, b_ref, o_ref, acc_ref, *, inv_s):
    # x_ref: (TB, TS, H)   w_ref: (H, O_pad)   b_ref: (1, O_pad)
    # o_ref: (TB, O_pad)   acc_ref: (TB, H) f32 scratch (pooled-sum accumulator)
    k = pl.program_id(1)

    @pl.when(k == 0)
    def _init():
        acc_ref[...] = jnp.zeros_like(acc_ref)

    # Per-tile sum over the sequence axis, accumulated in f32 (handles bf16 x).
    acc_ref[...] += jnp.sum(x_ref[...], axis=1, dtype=jnp.float32)

    @pl.when(k == pl.num_programs(1) - 1)
    def _finalize():
        pooled = acc_ref[...] * inv_s                               # (TB, H) f32
        # LayerNorm (affine already folded into W'/b' by the wrapper).
        mu = jnp.mean(pooled, axis=-1, keepdims=True)               # (TB, 1)
        centered = pooled - mu                                      # hoisted, reused
        var = jnp.mean(centered * centered, axis=-1, keepdims=True)
        normed = centered * jax.lax.rsqrt(var + LN_EPS)             # (TB, H)
        # Feed the MXU operands in the weight dtype (bf16 stays bf16).
        out = jnp.dot(normed.astype(w_ref.dtype), w_ref[...],
                      preferred_element_type=jnp.float32)
        out = out + b_ref[...].astype(jnp.float32)
        o_ref[...] = out.astype(o_ref.dtype)


# ----------------------------------------------------------------------------
# Tiling / budget helpers
# ----------------------------------------------------------------------------
def _sublane_align(dtype):
    # Packed sublane tiling: 8 rows for 4-byte, 16 for 2-byte, 32 for 1-byte.
    return {4: 8, 2: 16, 1: 32}.get(jnp.dtype(dtype).itemsize, 8)


def _divisors(n):
    return [d for d in range(1, n + 1) if n % d == 0]


def _aligned_divisors(n, align):
    # Divisors usable as a sublane block dim: multiples of `align`, plus the
    # full dimension (a full-extent block is always layout-legal).
    return [d for d in _divisors(n) if d % align == 0 or d == n]


def _default_x_tile_bytes():
    """Per-generation byte budget for one streamed (TB, TS, H) x tile."""
    vmem = None
    try:
        vmem = getattr(pltpu.get_tpu_info(), "vmem_capacity_bytes", None)
    except Exception:
        vmem = None
    if vmem is None:
        vmem = 64 << 20          # conservative (v7x-sized) assumption
    if vmem >= (96 << 20):       # v5e / v6e: 128 MiB physical VMEM
        return 12 << 20
    return 6 << 20               # v7x: 64 MiB physical VMEM


def _pick_tiles(B, S, H, x_dtype, out_dtype, x_tile_bytes, tb_pref=128):
    """Jointly pick (tb, ts): aligned divisors with tb*ts*H*itemsize <= budget."""
    itemsize = jnp.dtype(x_dtype).itemsize
    align_s = _sublane_align(x_dtype)             # sublane dim of the (ts, H) x block
    align_b = max(_sublane_align(out_dtype), 8)   # sublane dim of the (tb, o_pad) out

    # tb candidates: aligned divisors of B, capped at tb_pref and (when B is
    # large enough) at B//2 so grid[0] >= 2 and both v7x TensorCores get work.
    tb_cap = min(tb_pref, B)
    if B // 2 >= align_b:
        tb_cap = min(tb_cap, B // 2)
    tb_cands = sorted((d for d in _aligned_divisors(B, align_b) if d <= tb_cap),
                      reverse=True)
    if not tb_cands:              # tiny batch (< sublane align): full-B block
        tb_cands = [B]

    s_aligned = _aligned_divisors(S, align_s)     # perf-friendly (dtype-aware)
    s_legal = _aligned_divisors(S, 8)             # hard layout constraint (%8 or full)

    fallback = None
    for tb in tb_cands:           # shrink tb before settling for a tiny ts
        max_ts = x_tile_bytes // max(tb * H * itemsize, 1)
        fits = [t for t in s_aligned if t <= max_ts]
        if fits:
            return tb, max(fits)
        if fallback is None:
            legal_fit = [t for t in s_legal if t <= max_ts]
            if legal_fit:
                fallback = (tb, max(legal_fit))
    if fallback is not None:      # within the byte budget, just not dtype-packed
        return fallback
    # Even one minimal-S block per smallest tb exceeds the budget; take the
    # smallest layout-legal block (budget becomes advisory). Never full S.
    return tb_cands[-1], min(s_legal)


def _vmem_limit_bytes(tb, ts, H, o_pad, x_dtype, w_dtype, out_dtype):
    """Scoped-VMEM request from the actual resident footprint (+ ~25% headroom)."""
    xb = 2 * tb * ts * H * jnp.dtype(x_dtype).itemsize       # double-buffered x
    wb = 2 * H * o_pad * jnp.dtype(w_dtype).itemsize         # W' (worst case 2 bufs)
    bb = 2 * 8 * o_pad * 4                                   # b' (sublane-padded)
    ob = 2 * tb * o_pad * jnp.dtype(out_dtype).itemsize      # double-buffered out
    acc = tb * H * 4                                         # f32 scratch
    epi = 3 * tb * H * 4 + tb * o_pad * 4                    # finalize temporaries
    total = int((xb + wb + bb + ob + acc + epi) * 1.25) + (1 << 20)
    # Floor above every generation's default; cap safely below v7x's 64 MiB.
    return max(32 << 20, min(total, 56 << 20))


# ----------------------------------------------------------------------------
# pallas_call wrapper
# ----------------------------------------------------------------------------
def _gap_pallas_call(x, w_eff, b_eff, *, tb, ts, o_pad, vmem_limit,
                     single_buffer_weights):
    B, S, H = x.shape
    kernel = functools.partial(_gap_head_kernel, inv_s=1.0 / S)

    resident_kwargs = {}
    if single_buffer_weights:
        # Constant index maps -> a second pipeline buffer is never used; keep
        # W'/b' single-buffered to recover VMEM for the streamed x tile.
        resident_kwargs = dict(pipeline_mode=pl.Buffered(1))

    return pl.pallas_call(
        kernel,
        out_shape=jax.ShapeDtypeStruct((B, o_pad), x.dtype),
        grid_spec=pltpu.PrefetchScalarGridSpec(
            num_scalar_prefetch=0,
            grid=(B // tb, S // ts),                 # reduction (S) axis last
            in_specs=[
                pl.BlockSpec((tb, ts, H), lambda i, k: (i, k, 0)),   # streamed x
                pl.BlockSpec((H, o_pad), lambda i, k: (0, 0),
                             **resident_kwargs),                     # resident W'
                pl.BlockSpec((1, o_pad), lambda i, k: (0, 0),
                             **resident_kwargs),                     # resident b'
            ],
            out_specs=pl.BlockSpec((tb, o_pad), lambda i, k: (i, 0)),
            scratch_shapes=[pltpu.VMEM((tb, H), jnp.float32)],
        ),
        compiler_params=pltpu.CompilerParams(
            dimension_semantics=("parallel", "arbitrary"),
            vmem_limit_bytes=int(vmem_limit)),
    )(x, w_eff, b_eff)


def gap_head(x, gamma, beta, w, b, *, x_tile_bytes=None):
    """x: (B, S, H); gamma/beta: (H,); w: (H, O); b: (O,) -> (B, O)."""
    B, S, H = x.shape
    O = w.shape[1]
    f32 = jnp.float32

    # Fold the LayerNorm affine into the projection (one-time wrapper cost):
    #   (n*gamma + beta) @ W + b == n @ (gamma[:, None]*W) + (beta @ W + b)
    w_eff = (gamma.astype(f32)[:, None] * w.astype(f32)).astype(w.dtype)
    b_eff = beta.astype(f32) @ w.astype(f32) + b.astype(f32)

    # Lane-dense output: pad the projection out-dim to a multiple of 128.
    o_pad = max(128, pl.cdiv(O, 128) * 128)
    if o_pad != O:
        w_eff = jnp.pad(w_eff, ((0, 0), (0, o_pad - O)))
        b_eff = jnp.pad(b_eff, (0, o_pad - O))
    b_eff = b_eff.reshape(1, o_pad).astype(f32)

    if x_tile_bytes is None:
        x_tile_bytes = _default_x_tile_bytes()
    tb, ts = _pick_tiles(B, S, H, x.dtype, x.dtype, x_tile_bytes)
    vmem_limit = _vmem_limit_bytes(tb, ts, H, o_pad, x.dtype, w_eff.dtype, x.dtype)

    try:
        out_padded = _gap_pallas_call(
            x, w_eff, b_eff, tb=tb, ts=ts, o_pad=o_pad,
            vmem_limit=vmem_limit, single_buffer_weights=True)
    except Exception:
        # Fallback for builds that reject pl.Buffered(1): default double-buffered
        # weights are functionally identical (slightly larger VMEM footprint).
        out_padded = _gap_pallas_call(
            x, w_eff, b_eff, tb=tb, ts=ts, o_pad=o_pad,
            vmem_limit=vmem_limit, single_buffer_weights=False)

    return out_padded[:, :O]


def gap_head_ref(x, gamma, beta, w, b):
    pooled = jnp.mean(x.astype(jnp.float32), axis=1)
    mu = jnp.mean(pooled, axis=-1, keepdims=True)
    var = jnp.mean((pooled - mu) ** 2, axis=-1, keepdims=True)
    normed = (pooled - mu) * jax.lax.rsqrt(var + LN_EPS) * gamma + beta
    return normed @ w + b


if __name__ == "__main__":
    B, S, H, O = 2, 8, 32, 16  # batch, seq, hidden_size, out_dim

    key = jax.random.PRNGKey(0)
    kx, kw, kb, kg, kbt = jax.random.split(key, 5)

    x = jax.random.normal(kx, (B, S, H), dtype=jnp.float32)

    # Deterministic synthetic parameters (non-trivial affine to exercise the fold).
    gamma = 1.0 + 0.1 * jax.random.normal(kg, (H,), dtype=jnp.float32)
    beta = 0.05 * jax.random.normal(kbt, (H,), dtype=jnp.float32)
    # nn.Linear(H, O): weight is (O, H) in torch; stored transposed as (H, O) here.
    w = jax.random.normal(kw, (H, O), dtype=jnp.float32) * (1.0 / jnp.sqrt(H))
    b = jax.random.normal(kb, (O,), dtype=jnp.float32) * 0.01

    out = jax.block_until_ready(gap_head(x, gamma, beta, w, b))

    ref = gap_head_ref(x, gamma, beta, w, b)
    assert out.shape == (B, O)
    err = jnp.max(jnp.abs(out - ref))
    assert jnp.allclose(out, ref, atol=1e-4, rtol=1e-4), f"max abs err {err}"

    print("KERNEL_OK")
</pallas_src>

<mosaic_0001>
module attributes {stable_mosaic.version = 11 : i64} {
  func.func @_gap_head_kernel(%arg0: i32, %arg1: i32, %arg2: memref<2x8x32xf32, #tpu.memory_space<vmem>>, %arg3: memref<32x128xf32, #tpu.memory_space<vmem>>, %arg4: memref<1x128xf32, #tpu.memory_space<vmem>>, %arg5: memref<2x128xf32, #tpu.memory_space<vmem>>, %arg6: memref<2x32xf32, #tpu.memory_space<vmem>>) attributes {dimension_semantics = [#tpu.dimension_semantics<parallel>, #tpu.dimension_semantics<arbitrary>], iteration_bounds = array<i64: 1, 1>, scalar_prefetch = 0 : i64, scratch_operands = 1 : i64, tpu.core_type = #tpu.core_type<tc>, window_params = [{transform_indices = @transform_0, window_bounds = array<i64: 2, 8, 32>}, {pipeline_mode = #tpu.pipeline_mode<synchronous>, transform_indices = @transform_1, window_bounds = array<i64: 32, 128>}, {pipeline_mode = #tpu.pipeline_mode<synchronous>, transform_indices = @transform_2, window_bounds = array<i64: 1, 128>}, {transform_indices = @transform_3, window_bounds = array<i64: 2, 128>}]} {
    %c0_i32 = arith.constant 0 : i32
    %0 = arith.cmpi eq, %arg1, %c0_i32 : i32
    %1 = arith.extui %0 : i1 to i32
    %c0_i32_0 = arith.constant 0 : i32
    %2 = arith.cmpi ne, %1, %c0_i32_0 : i32
    scf.if %2 {
      %cst_9 = arith.constant 0.000000e+00 : f32
      %11 = vector.broadcast %cst_9 : f32 to vector<2x32xf32>
      %c0_10 = arith.constant 0 : index
      %c0_11 = arith.constant 0 : index
      %12 = vector.load %arg6[%c0_10, %c0_11] : memref<2x32xf32, #tpu.memory_space<vmem>>, vector<2x32xf32>
      tpu.vector_store %arg6[%c0_10, %c0_11], %11 {strides = array<i32>} : memref<2x32xf32, #tpu.memory_space<vmem>>, vector<2x32xf32>,
    } else {
    }
    %c0 = arith.constant 0 : index
    %c0_1 = arith.constant 0 : index
    %3 = vector.load %arg6[%c0, %c0_1] : memref<2x32xf32, #tpu.memory_space<vmem>>, vector<2x32xf32>
    %c0_2 = arith.constant 0 : index
    %c0_3 = arith.constant 0 : index
    %c0_4 = arith.constant 0 : index
    %4 = vector.load %arg2[%c0_2, %c0_3, %c0_4] : memref<2x8x32xf32, #tpu.memory_space<vmem>>, vector<2x8x32xf32>
    %cst = arith.constant dense<0.000000e+00> : vector<2x32xf32>
    %5 = vector.multi_reduction <add>, %4, %cst [1] : vector<2x8x32xf32> to vector<2x32xf32>
    %6 = arith.addf %3, %5 : vector<2x32xf32>
    %c0_5 = arith.constant 0 : index
    %c0_6 = arith.constant 0 : index
    %7 = vector.load %arg6[%c0_5, %c0_6] : memref<2x32xf32, #tpu.memory_space<vmem>>, vector<2x32xf32>
    tpu.vector_store %arg6[%c0_5, %c0_6], %6 {strides = array<i32>} : memref<2x32xf32, #tpu.memory_space<vmem>>, vector<2x32xf32>,
    %c0_i32_7 = arith.constant 0 : i32
    %8 = arith.cmpi eq, %arg1, %c0_i32_7 : i32
    %9 = arith.extui %8 : i1 to i32
    %c0_i32_8 = arith.constant 0 : i32
    %10 = arith.cmpi ne, %9, %c0_i32_8 : i32
    scf.if %10 {
      %c0_9 = arith.constant 0 : index
      %c0_10 = arith.constant 0 : index
      %11 = vector.load %arg6[%c0_9, %c0_10] : memref<2x32xf32, #tpu.memory_space<vmem>>, vector<2x32xf32>
      %cst_11 = arith.constant 1.250000e-01 : f32
      %12 = vector.broadcast %cst_11 : f32 to vector<2x32xf32>
      %13 = arith.mulf %11, %12 : vector<2x32xf32>
      %cst_12 = arith.constant dense<0.000000e+00> : vector<2xf32>
      %14 = vector.multi_reduction <add>, %13, %cst_12 [1] : vector<2x32xf32> to vector<2xf32>
      %15 = vector.shape_cast %14 : vector<2xf32> to vector<2x1xf32>
      %cst_13 = arith.constant 3.200000e+01 : f32
      %16 = vector.broadcast %cst_13 : f32 to vector<2x1xf32>
      %17 = arith.divf %15, %16 : vector<2x1xf32>
      %18 = vector.broadcast %17 : vector<2x1xf32> to vector<2x32xf32>
      %19 = arith.subf %13, %18 : vector<2x32xf32>
      %20 = arith.mulf %19, %19 : vector<2x32xf32>
      %cst_14 = arith.constant dense<0.000000e+00> : vector<2xf32>
      %21 = vector.multi_reduction <add>, %20, %cst_14 [1] : vector<2x32xf32> to vector<2xf32>
      %22 = vector.shape_cast %21 : vector<2xf32> to vector<2x1xf32>
      %cst_15 = arith.constant 3.200000e+01 : f32
      %23 = vector.broadcast %cst_15 : f32 to vector<2x1xf32>
      %24 = arith.divf %22, %23 : vector<2x1xf32>
      %cst_16 = arith.constant 9.99999974E-6 : f32
      %25 = vector.broadcast %cst_16 : f32 to vector<2x1xf32>
      %26 = arith.addf %24, %25 : vector<2x1xf32>
      %27 = math.rsqrt %26 : vector<2x1xf32>
      %28 = vector.broadcast %27 : vector<2x1xf32> to vector<2x32xf32>
      %29 = arith.mulf %19, %28 : vector<2x32xf32>
      %c0_17 = arith.constant 0 : index
      %c0_18 = arith.constant 0 : index
      %30 = vector.load %arg3[%c0_17, %c0_18] : memref<32x128xf32, #tpu.memory_space<vmem>>, vector<32x128xf32>
      %cst_19 = arith.constant dense<0.000000e+00> : vector<2x128xf32>
      %31 = tpu.matmul %29, %30, %cst_19 {dimension_numbers = #tpu.dot_dimension_numbers<[1], [0], [0], [1], [0, 0, 1, 1], [], []>} : vector<2x32xf32>, vector<32x128xf32>, vector<2x128xf32> -> vector<2x128xf32>
      %c0_20 = arith.constant 0 : index
      %c0_21 = arith.constant 0 : index
      %32 = vector.load %arg4[%c0_20, %c0_21] : memref<1x128xf32, #tpu.memory_space<vmem>>, vector<1x128xf32>
      %33 = vector.broadcast %32 : vector<1x128xf32> to vector<2x128xf32>
      %34 = arith.addf %31, %33 : vector<2x128xf32>
      %c0_22 = arith.constant 0 : index
      %c0_23 = arith.constant 0 : index
      %35 = vector.load %arg5[%c0_22, %c0_23] : memref<2x128xf32, #tpu.memory_space<vmem>>, vector<2x128xf32>
      tpu.vector_store %arg5[%c0_22, %c0_23], %34 {strides = array<i32>} : memref<2x128xf32, #tpu.memory_space<vmem>>, vector<2x128xf32>,
    } else {
    }
    return
  }
  func.func @transform_0(%arg0: i32, %arg1: i32) -> (i32, i32, i32) {
    %c0_i32 = arith.constant 0 : i32
    %c0_i32_0 = arith.constant 0 : i32
    return %arg0, %arg1, %c0_i32 : i32, i32, i32
  }
  func.func @transform_1(%arg0: i32, %arg1: i32) -> (i32, i32) {
    %c0_i32 = arith.constant 0 : i32
    %c0_i32_0 = arith.constant 0 : i32
    %c0_i32_1 = arith.constant 0 : i32
    return %c0_i32, %c0_i32_0 : i32, i32
  }
  func.func @transform_2(%arg0: i32, %arg1: i32) -> (i32, i32) {
    %c0_i32 = arith.constant 0 : i32
    %c0_i32_0 = arith.constant 0 : i32
    %c0_i32_1 = arith.constant 0 : i32
    return %c0_i32, %c0_i32_0 : i32, i32
  }
  func.func @transform_3(%arg0: i32, %arg1: i32) -> (i32, i32) {
    %c0_i32 = arith.constant 0 : i32
    %c0_i32_0 = arith.constant 0 : i32
    return %arg0, %c0_i32 : i32, i32
  }
}

module attributes {stable_mosaic.version = 11 : i64} {
  func.func @_gap_head_kernel(%arg0: i32, %arg1: i32, %arg2: memref<2x8x32xf32, #tpu.memory_space<vmem>>, %arg3: memref<32x128xf32, #tpu.memory_space<vmem>>, %arg4: memref<1x128xf32, #tpu.memory_space<vmem>>, %arg5: memref<2x128xf32, #tpu.memory_space<vmem>>, %arg6: memref<2x32xf32, #tpu.memory_space<vmem>>) attributes {dimension_semantics = [#tpu.dimension_semantics<parallel>, #tpu.dimension_semantics<arbitrary>], iteration_bounds = array<i64: 1, 1>, scalar_prefetch = 0 : i64, scratch_operands = 1 : i64, tpu.core_type = #tpu.core_type<tc>, window_params = [{transform_indices = @transform_0, window_bounds = array<i64: 2, 8, 32>}, {pipeline_mode = #tpu.pipeline_mode<synchronous>, transform_indices = @transform_1, window_bounds = array<i64: 32, 128>}, {pipeline_mode = #tpu.pipeline_mode<synchronous>, transform_indices = @transform_2, window_bounds = array<i64: 1, 128>}, {transform_indices = @transform_3, window_bounds = array<i64: 2, 128>}]} {
    %c0_i32 = arith.constant 0 : i32
    %0 = arith.cmpi eq, %arg1, %c0_i32 : i32
    %1 = arith.extui %0 : i1 to i32
    %c0_i32_0 = arith.constant 0 : i32
    %2 = arith.cmpi ne, %1, %c0_i32_0 : i32
    scf.if %2 {
      %cst_9 = arith.constant 0.000000e+00 : f32
      %11 = vector.broadcast %cst_9 : f32 to vector<2x32xf32>
      %c0_10 = arith.constant 0 : index
      %c0_11 = arith.constant 0 : index
      %12 = vector.load %arg6[%c0_10, %c0_11] : memref<2x32xf32, #tpu.memory_space<vmem>>, vector<2x32xf32>
      tpu.vector_store %arg6[%c0_10, %c0_11], %11 {strides = array<i32>} : memref<2x32xf32, #tpu.memory_space<vmem>>, vector<2x32xf32>,
    } else {
    }
    %c0 = arith.constant 0 : index
    %c0_1 = arith.constant 0 : index
    %3 = vector.load %arg6[%c0, %c0_1] : memref<2x32xf32, #tpu.memory_space<vmem>>, vector<2x32xf32>
    %c0_2 = arith.constant 0 : index
    %c0_3 = arith.constant 0 : index
    %c0_4 = arith.constant 0 : index
    %4 = vector.load %arg2[%c0_2, %c0_3, %c0_4] : memref<2x8x32xf32, #tpu.memory_space<vmem>>, vector<2x8x32xf32>
    %cst = arith.constant dense<0.000000e+00> : vector<2x32xf32>
    %5 = vector.multi_reduction <add>, %4, %cst [1] : vector<2x8x32xf32> to vector<2x32xf32>
    %6 = arith.addf %3, %5 : vector<2x32xf32>
    %c0_5 = arith.constant 0 : index
    %c0_6 = arith.constant 0 : index
    %7 = vector.load %arg6[%c0_5, %c0_6] : memref<2x32xf32, #tpu.memory_space<vmem>>, vector<2x32xf32>
    tpu.vector_store %arg6[%c0_5, %c0_6], %6 {strides = array<i32>} : memref<2x32xf32, #tpu.memory_space<vmem>>, vector<2x32xf32>,
    %c0_i32_7 = arith.constant 0 : i32
    %8 = arith.cmpi eq, %arg1, %c0_i32_7 : i32
    %9 = arith.extui %8 : i1 to i32
    %c0_i32_8 = arith.constant 0 : i32
    %10 = arith.cmpi ne, %9, %c0_i32_8 : i32
    scf.if %10 {
      %c0_9 = arith.constant 0 : index
      %c0_10 = arith.constant 0 : index
      %11 = vector.load %arg6[%c0_9, %c0_10] : memref<2x32xf32, #tpu.memory_space<vmem>>, vector<2x32xf32>
      %cst_11 = arith.constant 1.250000e-01 : f32
      %12 = vector.broadcast %cst_11 : f32 to vector<2x32xf32>
      %13 = arith.mulf %11, %12 : vector<2x32xf32>
      %cst_12 = arith.constant dense<0.000000e+00> : vector<2xf32>
      %14 = vector.multi_reduction <add>, %13, %cst_12 [1] : vector<2x32xf32> to vector<2xf32>
      %15 = vector.shape_cast %14 : vector<2xf32> to vector<2x1xf32>
      %cst_13 = arith.constant 3.200000e+01 : f32
      %16 = vector.broadcast %cst_13 : f32 to vector<2x1xf32>
      %17 = arith.divf %15, %16 : vector<2x1xf32>
      %18 = vector.broadcast %17 : vector<2x1xf32> to vector<2x32xf32>
      %19 = arith.subf %13, %18 : vector<2x32xf32>
      %20 = arith.mulf %19, %19 : vector<2x32xf32>
      %cst_14 = arith.constant dense<0.000000e+00> : vector<2xf32>
      %21 = vector.multi_reduction <add>, %20, %cst_14 [1] : vector<2x32xf32> to vector<2xf32>
      %22 = vector.shape_cast %21 : vector<2xf32> to vector<2x1xf32>
      %cst_15 = arith.constant 3.200000e+01 : f32
      %23 = vector.broadcast %cst_15 : f32 to vector<2x1xf32>
      %24 = arith.divf %22, %23 : vector<2x1xf32>
      %cst_16 = arith.constant 9.99999974E-6 : f32
      %25 = vector.broadcast %cst_16 : f32 to vector<2x1xf32>
      %26 = arith.addf %24, %25 : vector<2x1xf32>
      %27 = math.rsqrt %26 : vector<2x1xf32>
      %28 = vector.broadcast %27 : vector<2x1xf32> to vector<2x32xf32>
      %29 = arith.mulf %19, %28 : vector<2x32xf32>
      %c0_17 = arith.constant 0 : index
      %c0_18 = arith.constant 0 : index
      %30 = vector.load %arg3[%c0_17, %c0_18] : memref<32x128xf32, #tpu.memory_space<vmem>>, vector<32x128xf32>
      %cst_19 = arith.constant dense<0.000000e+00> : vector<2x128xf32>
      %31 = tpu.matmul %29, %30, %cst_19 {dimension_numbers = #tpu.dot_dimension_numbers<[1], [0], [0], [1], [0, 0, 1, 1], [], []>} : vector<2x32xf32>, vector<32x128xf32>, vector<2x128xf32> -> vector<2x128xf32>
      %c0_20 = arith.constant 0 : index
      %c0_21 = arith.constant 0 : index
      %32 = vector.load %arg4[%c0_20, %c0_21] : memref<1x128xf32, #tpu.memory_space<vmem>>, vector<1x128xf32>
      %33 = vector.broadcast %32 : vector<1x128xf32> to vector<2x128xf32>
      %34 = arith.addf %31, %33 : vector<2x128xf32>
      %c0_22 = arith.constant 0 : index
      %c0_23 = arith.constant 0 : index
      %35 = vector.load %arg5[%c0_22, %c0_23] : memref<2x128xf32, #tpu.memory_space<vmem>>, vector<2x128xf32>
      tpu.vector_store %arg5[%c0_22, %c0_23], %34 {strides = array<i32>} : memref<2x128xf32, #tpu.memory_space<vmem>>, vector<2x128xf32>,
    } else {
    }
    return
  }
  func.func @transform_0(%arg0: i32, %arg1: i32) -> (i32, i32, i32) {
    %c0_i32 = arith.constant 0 : i32
    %c0_i32_0 = arith.constant 0 : i32
    return %arg0, %arg1, %c0_i32 : i32, i32, i32
  }
  func.func @transform_1(%arg0: i32, %arg1: i32) -> (i32, i32) {
    %c0_i32 = arith.constant 0 : i32
    %c0_i32_0 = arith.constant 0 : i32
    %c0_i32_1 = arith.constant 0 : i32
    return %c0_i32, %c0_i32_0 : i32, i32
  }
  func.func @transform_2(%arg0: i32, %arg1: i32) -> (i32, i32) {
    %c0_i32 = arith.constant 0 : i32
    %c0_i32_0 = arith.constant 0 : i32
    %c0_i32_1 = arith.constant 0 : i32
    return %c0_i32, %c0_i32_0 : i32, i32
  }
  func.func @transform_3(%arg0: i32, %arg1: i32) -> (i32, i32) {
    %c0_i32 = arith.constant 0 : i32
    %c0_i32_0 = arith.constant 0 : i32
    return %arg0, %c0_i32 : i32, i32
  }
}

</mosaic_0001>

<llo_original>
// kernel: tpu_custom_call.1
$region0: #{tpu_custom_call.1}
  #allocation0 [shape = 'u32[]', space=smem, size = 0x4, offset = 0x4, fixed_abs, tag = 'smem constant byte address 0x4 - core index']
  #allocation1 [shape = 'u32[72,128]{1,0:T(1,128)}', space=vmem, size = 0x9000, scoped, tag = 'internal scratch']
  #allocation2 [shape = 'f32[2,32]{1,0:T(2,128)}', space=vmem, size = 0x400, scoped, tag = 'scratch operand']
  %s0 = inlined_call_operand.hbm [shape: f32[2,8,32], index: 0, kind: input, shape index: {}]
  %s1 = inlined_call_operand.hbm [shape: f32[32,128], index: 1, kind: input, shape index: {}]
  %s2 = inlined_call_operand.vmem [shape: f32[1,128], index: 2, kind: input, shape index: {}]
  %s3 = inlined_call_operand.hbm [shape: f32[2,128], index: 3, kind: output, shape index: {}]
  %s4 = sld [smem:[#allocation0]]
  $region38: #{tpu_custom_call.1} parent=0
    _
  %s6 = ssub.s32 1, %s4
  %s7 = scalar_select 0, %s6, %s4
  $region1: #{tpu_custom_call.1} parent=0
    #allocation3 [shape = 'u8[8192]{0}', space=vmem, size = 0x2000, scoped, tag = 'input window, operand 0, single buffered']
    #allocation4 [shape = 's32[1]{0}', space=sflag, size = 0x4, scoped, tag = 'scoped memory for tpu_custom_call.1']
    #allocation5 [shape = 's32[1]{0}', space=sflag, size = 0x4, scoped, tag = 'scoped memory for tpu_custom_call.1']
    #allocation6 [shape = 'u8[16384]{0}', space=vmem, size = 0x4000, scoped, tag = 'input window, operand 1, single buffered']
    #allocation7 [shape = 's32[1]{0}', space=sflag, size = 0x4, scoped, tag = 'scoped memory for tpu_custom_call.1']
    #allocation8 [shape = 'u8[1024]{0}', space=vmem, size = 0x400, scoped, tag = 'output window, operand 0, single buffered']
    %8 = vsyncpa [#allocation4], 0
    %9 = vsyncpa [#allocation7], 0
    %10 = vsyncpa [#allocation5], 0
    // Predicated region
    $region2: #{tpu_custom_call.1} parent=1 // pred_check
      _
    $region3: #{tpu_custom_call.1} parent=1 // pred_check_branch
      %12 = sbr.rel (0) target = $region5
    $region4: #{tpu_custom_call.1} parent=1 // pred_region
      %14 = vsyncadd [#allocation4], 0
      %s15 = sshll.u32 %s0, 4
      %s16 = int_to_ptr.hbm [resolvable:$true] %s15
      %s17 = sshll.u32 [#allocation3], 4
      %s18 = int_to_ptr.vmem [resolvable:$true] %s17
      %23 = dma.hbm_to_vmem [thread:$0]  %s16, 256, %s18, [#allocation4], 128, 128, 8
    $region5: #{tpu_custom_call.1} parent=1 // pred_fallthru
      _
    // Predicated region
    $region6: #{tpu_custom_call.1} parent=1 // pred_check
      _
    $region7: #{tpu_custom_call.1} parent=1 // pred_check_branch
      %25 = sbr.rel (0) target = $region9
    $region8: #{tpu_custom_call.1} parent=1 // pred_region
      %27 = vsyncadd [#allocation7], 0
      %s28 = sshll.u32 %s1, 4
      %s29 = int_to_ptr.hbm [resolvable:$true] %s28
      %s30 = sshll.u32 [#allocation6], 4
      %s31 = int_to_ptr.vmem [resolvable:$true] %s30
      %36 = dma.hbm_to_vmem [thread:$0]  %s29, 512, %s31, [#allocation7], 128, 128, 8
    $region9: #{tpu_custom_call.1} parent=1 // pred_fallthru
      _
    // Predicated region
    $region10: #{tpu_custom_call.1} parent=1 // pred_check
      _
    $region11: #{tpu_custom_call.1} parent=1 // pred_check_branch
      %38 = sbr.rel (0) target = $region13
    $region12: #{tpu_custom_call.1} parent=1 // pred_region
      _
    $region13: #{tpu_custom_call.1} parent=1 // pred_fallthru
      _
    // Predicated region
    $region14: #{tpu_custom_call.1} parent=1 // pred_check
      _
    $region15: #{tpu_custom_call.1} parent=1 // pred_check_branch
      %40 = sbr.rel (0) target = $region17
    $region16: #{tpu_custom_call.1} parent=1 // pred_region
      %42 = dma.done [#allocation4], 256
    $region17: #{tpu_custom_call.1} parent=1 // pred_fallthru
      _
    // Predicated region
    $region18: #{tpu_custom_call.1} parent=1 // pred_check
      _
    $region19: #{tpu_custom_call.1} parent=1 // pred_check_branch
      %44 = sbr.rel (0) target = $region21
    $region20: #{tpu_custom_call.1} parent=1 // pred_region
      %46 = dma.done [#allocation7], 512
    $region21: #{tpu_custom_call.1} parent=1 // pred_fallthru
      _
    %p47 = scmp.eq.s32.totalorder 0, 0
    // Predicated region
    $region22: #{tpu_custom_call.1} parent=1 // pred_check
      %p48 = pneg %p47
    $region23: #{tpu_custom_call.1} parent=1 // pred_check_branch
      %50 = sbr.rel (%p48) target = $region25
    $region24: #{tpu_custom_call.1} parent=1 // pred_region
      %vm51 = vcmask 254976
      %52 = vst.msk [vmem:[#allocation2] sm:$0x3] %vm51, 0.0
    $region25: #{tpu_custom_call.1} parent=1 // pred_fallthru
      _
    %v53 = vld [vmem:[#allocation2] sm:$0x3]
    %v54 = vld [vmem:[#allocation3] sm:$0xff]
    %v55 = vld [vmem:[#allocation3 + $0x8] sm:$0xff]
    %vm56 = vcmask 261120
    %v57 = vsel %vm56, %v54, 0.0
    %v58 = vrot.slane %v57, 4
    %v59 = vadd.f32 %v57, %v58
    %v60 = vrot.slane %v59, 2
    %v61 = vadd.f32 %v59, %v60
    %v62 = vrot.slane %v61, 1
    %v63 = vadd.f32 %v61, %v62
    %v64 = vsel %vm56, %v55, 0.0
    %v65 = vrot.slane %v64, 4
    %v66 = vadd.f32 %v64, %v65
    %v67 = vrot.slane %v66, 2
    %v68 = vadd.f32 %v66, %v67
    %v69 = vrot.slane %v68, 1
    %v70 = vadd.f32 %v68, %v69
    %vm73 = vcmask 1041409
    %v74 = vsel %vm73, %v70, %v63
    %v76 = vadd.f32 %v53, %v74
    %vm77 = vcmask 254976
    %78 = vst.msk [vmem:[#allocation2] sm:$0x3] %vm77, %v76
    // Predicated region
    $region26: #{tpu_custom_call.1} parent=1 // pred_check
      %p79 = pneg %p47
    $region27: #{tpu_custom_call.1} parent=1 // pred_check_branch
      %81 = sbr.rel (%p79) target = $region29
    $region28: #{tpu_custom_call.1} parent=1 // pred_region
      %v82 = vld [vmem:[#allocation2] sm:$0x3]
      %v83 = vmul.f32 %v82, 0.125
      %v84 = vsel %vm77, %v83, 0.0
      %85 = vadd.xlane.f32.xlu0 %v84
      %v86 = vpop.xlane.xlu0 %85
      %v87 = vrcp.pop 32.0
      %v88 = vmul.f32 32.0, %v87
      %v89 = vsub.f32 1.0, %v88
      %v90 = vmul.f32 %v87, %v89
      %v91 = vadd.f32 %v87, %v90
      %vm92 = vweird.f32 %v87
      %v93 = vsel %vm92, %v87, %v91
      %v94 = vmul.f32 %v86, %v93
      %v95 = vsub.f32 %v83, %v94
      %v96 = vmul.f32 %v95, %v95
      %v97 = vsel %vm77, %v96, 0.0
      %98 = vadd.xlane.f32.xlu0 %v97
      %v99 = vpop.xlane.xlu0 %98
      %v100 = vmul.f32 %v99, %v93
      %v101 = vadd.f32 %v100, 1e-05
      %v102 = vrsqrt.pop %v101
      %v103 = vmul.f32 %v102, %v101
      %v104 = vmul.f32 %v103, %v102
      %v105 = vmul.f32 0.5, %v104
      %v106 = vsub.f32 1.5, %v105
      %v107 = vmul.f32 %v102, %v106
      %vm108 = vweird.f32 %v101
      %vm109 = vweird.f32 %v102
      %vm110 = vmor %vm108, %vm109
      %v111 = vsel %vm110, %v102, %v107
      %v112 = vmul.f32 %v95, %v111
      %v113 = vld [vmem:[#allocation6] sm:$0xff]
      %v114 = vld [vmem:[#allocation6 + $0x8] sm:$0xff]
      %v115 = vld [vmem:[#allocation6 + $0x10] sm:$0xff]
      %v116 = vld [vmem:[#allocation6 + $0x18] sm:$0xff]
      %v117 = vld [vmem:[%s2] sm:$0x1]
      %v119 = vperm.slane %v117, 0
      %v122 = vsel %vm56, %v112, 0
      %124 = vmatpush.msra.mxu0 0.0
      %125 = vmatpush.msra.mxu0 0.0
      %126 = vmatpush.msra.mxu0 0.0
      %127 = vmatpush.msra.mxu0 0.0
      %128 = vmatpush.msra.mxu0 0.0
      %129 = vmatpush.msra.mxu0 0.0
      %130 = vmatpush.msra.mxu0 0.0
      %131 = vmatpush.msra.mxu0 0.0
      %132 = vmatpush.msra.mxu0 0.0
      %133 = vmatpush.msra.mxu0 0.0
      %134 = vmatpush.msra.mxu0 0.0
      %135 = vmatpush.msra.mxu0 0.0
      %136 = vmatpush.msra.mxu0 %v116
      %137 = vmatpush.msra.mxu0 %v115
      %138 = vmatpush.msra.mxu0 %v114
      %139 = vmatpush.msra.mxu0 %v113
      %140 = vmatmul.f32.gmra.mxu0 %v122
      %v141 = vpop.f32.mrf.mxu0
      %v142 = vadd.f32 %v119, %v141
      %143 = vdwg.mxu0
      %144 = vst [vmem:[#allocation8] sm:$0x3] %v142
    $region29: #{tpu_custom_call.1} parent=1 // pred_fallthru
      _
    // Predicated region
    $region30: #{tpu_custom_call.1} parent=1 // pred_check
      _
    $region31: #{tpu_custom_call.1} parent=1 // pred_check_branch
      %146 = sbr.rel (0) target = $region33
    $region32: #{tpu_custom_call.1} parent=1 // pred_region
      %148 = vsyncadd [#allocation5], 0
      %s150 = sshll.u32 [#allocation8], 4
      %s151 = int_to_ptr.vmem [resolvable:$true] %s150
      %s152 = sshll.u32 %s3, 4
      %s153 = int_to_ptr.hbm [resolvable:$true] %s152
      %155 = dma.vmem_to_hbm [thread:$0]  %s151, 32, %s153, [#allocation5]
    $region33: #{tpu_custom_call.1} parent=1 // pred_fallthru
      _
    // Predicated region
    $region34: #{tpu_custom_call.1} parent=1 // pred_check
      _
    $region35: #{tpu_custom_call.1} parent=1 // pred_check_branch
      %157 = sbr.rel (0) target = $region37
    $region36: #{tpu_custom_call.1} parent=1 // pred_region
      %159 = dma.done [#allocation5], 32
    $region37: #{tpu_custom_call.1} parent=1 // pred_fallthru
      _
    %160 = vsyncpa [#allocation4], 1
    %161 = vsyncpa [#allocation7], 1
    %162 = vsyncpa [#allocation5], 1

// kernel: tpu_custom_call.1
$region0: #{tpu_custom_call.1}
  #allocation0 [shape = 'u32[]', space=smem, size = 0x4, offset = 0x4, fixed_abs, tag = 'smem constant byte address 0x4 - core index']
  #allocation1 [shape = 'u32[72,128]{1,0:T(1,128)}', space=vmem, size = 0x9000, scoped, tag = 'internal scratch']
  #allocation2 [shape = 'f32[2,32]{1,0:T(2,128)}', space=vmem, size = 0x400, scoped, tag = 'scratch operand']
  %s0 = inlined_call_operand.hbm [shape: f32[2,8,32], index: 0, kind: input, shape index: {}]
  %s1 = inlined_call_operand.hbm [shape: f32[32,128], index: 1, kind: input, shape index: {}]
  %s2 = inlined_call_operand.vmem [shape: f32[1,128], index: 2, kind: input, shape index: {}]
  %s3 = inlined_call_operand.hbm [shape: f32[2,128], index: 3, kind: output, shape index: {}]
  %s4 = sld [smem:[#allocation0]]
  $region38: #{tpu_custom_call.1} parent=0
    _
  %s6 = ssub.s32 1, %s4
  %s7 = scalar_select 0, %s6, %s4
  $region1: #{tpu_custom_call.1} parent=0
    #allocation3 [shape = 'u8[8192]{0}', space=vmem, size = 0x2000, scoped, tag = 'input window, operand 0, single buffered']
    #allocation4 [shape = 's32[1]{0}', space=sflag, size = 0x4, scoped, tag = 'scoped memory for tpu_custom_call.1']
    #allocation5 [shape = 's32[1]{0}', space=sflag, size = 0x4, scoped, tag = 'scoped memory for tpu_custom_call.1']
    #allocation6 [shape = 'u8[16384]{0}', space=vmem, size = 0x4000, scoped, tag = 'input window, operand 1, single buffered']
    #allocation7 [shape = 's32[1]{0}', space=sflag, size = 0x4, scoped, tag = 'scoped memory for tpu_custom_call.1']
    #allocation8 [shape = 'u8[1024]{0}', space=vmem, size = 0x400, scoped, tag = 'output window, operand 0, single buffered']
    %8 = vsyncpa [#allocation4], 0
    %9 = vsyncpa [#allocation7], 0
    %10 = vsyncpa [#allocation5], 0
    // Predicated region
    $region2: #{tpu_custom_call.1} parent=1 // pred_check
      _
    $region3: #{tpu_custom_call.1} parent=1 // pred_check_branch
      %12 = sbr.rel (0) target = $region5
    $region4: #{tpu_custom_call.1} parent=1 // pred_region
      %14 = vsyncadd [#allocation4], 0
      %s15 = sshll.u32 %s0, 4
      %s16 = int_to_ptr.hbm [resolvable:$true] %s15
      %s17 = sshll.u32 [#allocation3], 4
      %s18 = int_to_ptr.vmem [resolvable:$true] %s17
      %23 = dma.hbm_to_vmem [thread:$0]  %s16, 256, %s18, [#allocation4], 128, 128, 8
    $region5: #{tpu_custom_call.1} parent=1 // pred_fallthru
      _
    // Predicated region
    $region6: #{tpu_custom_call.1} parent=1 // pred_check
      _
    $region7: #{tpu_custom_call.1} parent=1 // pred_check_branch
      %25 = sbr.rel (0) target = $region9
    $region8: #{tpu_custom_call.1} parent=1 // pred_region
      %27 = vsyncadd [#allocation7], 0
      %s28 = sshll.u32 %s1, 4
      %s29 = int_to_ptr.hbm [resolvable:$true] %s28
      %s30 = sshll.u32 [#allocation6], 4
      %s31 = int_to_ptr.vmem [resolvable:$true] %s30
      %36 = dma.hbm_to_vmem [thread:$0]  %s29, 512, %s31, [#allocation7], 128, 128, 8
    $region9: #{tpu_custom_call.1} parent=1 // pred_fallthru
      _
    // Predicated region
    $region10: #{tpu_custom_call.1} parent=1 // pred_check
      _
    $region11: #{tpu_custom_call.1} parent=1 // pred_check_branch
      %38 = sbr.rel (0) target = $region13
    $region12: #{tpu_custom_call.1} parent=1 // pred_region
      _
    $region13: #{tpu_custom_call.1} parent=1 // pred_fallthru
      _
    // Predicated region
    $region14: #{tpu_custom_call.1} parent=1 // pred_check
      _
    $region15: #{tpu_custom_call.1} parent=1 // pred_check_branch
      %40 = sbr.rel (0) target = $region17
    $region16: #{tpu_custom_call.1} parent=1 // pred_region
      %42 = dma.done [#allocation4], 256
    $region17: #{tpu_custom_call.1} parent=1 // pred_fallthru
      _
    // Predicated region
    $region18: #{tpu_custom_call.1} parent=1 // pred_check
      _
    $region19: #{tpu_custom_call.1} parent=1 // pred_check_branch
      %44 = sbr.rel (0) target = $region21
    $region20: #{tpu_custom_call.1} parent=1 // pred_region
      %46 = dma.done [#allocation7], 512
    $region21: #{tpu_custom_call.1} parent=1 // pred_fallthru
      _
    %p47 = scmp.eq.s32.totalorder 0, 0
    // Predicated region
    $region22: #{tpu_custom_call.1} parent=1 // pred_check
      %p48 = pneg %p47
    $region23: #{tpu_custom_call.1} parent=1 // pred_check_branch
      %50 = sbr.rel (%p48) target = $region25
    $region24: #{tpu_custom_call.1} parent=1 // pred_region
      %vm51 = vcmask 254976
      %52 = vst.msk [vmem:[#allocation2] sm:$0x3] %vm51, 0.0
    $region25: #{tpu_custom_call.1} parent=1 // pred_fallthru
      _
    %v53 = vld [vmem:[#allocation2] sm:$0x3]
    %v54 = vld [vmem:[#allocation3] sm:$0xff]
    %v55 = vld [vmem:[#allocation3 + $0x8] sm:$0xff]
    %vm56 = vcmask 261120
    %v57 = vsel %vm56, %v54, 0.0
    %v58 = vrot.slane %v57, 4
    %v59 = vadd.f32 %v57, %v58
    %v60 = vrot.slane %v59, 2
    %v61 = vadd.f32 %v59, %v60
    %v62 = vrot.slane %v61, 1
    %v63 = vadd.f32 %v61, %v62
    %v64 = vsel %vm56, %v55, 0.0
    %v65 = vrot.slane %v64, 4
    %v66 = vadd.f32 %v64, %v65
    %v67 = vrot.slane %v66, 2
    %v68 = vadd.f32 %v66, %v67
    %v69 = vrot.slane %v68, 1
    %v70 = vadd.f32 %v68, %v69
    %vm73 = vcmask 1041409
    %v74 = vsel %vm73, %v70, %v63
    %v76 = vadd.f32 %v53, %v74
    %vm77 = vcmask 254976
    %78 = vst.msk [vmem:[#allocation2] sm:$0x3] %vm77, %v76
    // Predicated region
    $region26: #{tpu_custom_call.1} parent=1 // pred_check
      %p79 = pneg %p47
    $region27: #{tpu_custom_call.1} parent=1 // pred_check_branch
      %81 = sbr.rel (%p79) target = $region29
    $region28: #{tpu_custom_call.1} parent=1 // pred_region
      %v82 = vld [vmem:[#allocation2] sm:$0x3]
      %v83 = vmul.f32 %v82, 0.125
      %v84 = vsel %vm77, %v83, 0.0
      %85 = vadd.xlane.f32.xlu0 %v84
      %v86 = vpop.xlane.xlu0 %85
      %v87 = vrcp.pop 32.0
      %v88 = vmul.f32 32.0, %v87
      %v89 = vsub.f32 1.0, %v88
      %v90 = vmul.f32 %v87, %v89
      %v91 = vadd.f32 %v87, %v90
      %vm92 = vweird.f32 %v87
      %v93 = vsel %vm92, %v87, %v91
      %v94 = vmul.f32 %v86, %v93
      %v95 = vsub.f32 %v83, %v94
      %v96 = vmul.f32 %v95, %v95
      %v97 = vsel %vm77, %v96, 0.0
      %98 = vadd.xlane.f32.xlu0 %v97
      %v99 = vpop.xlane.xlu0 %98
      %v100 = vmul.f32 %v99, %v93
      %v101 = vadd.f32 %v100, 1e-05
      %v102 = vrsqrt.pop %v101
      %v103 = vmul.f32 %v102, %v101
      %v104 = vmul.f32 %v103, %v102
      %v105 = vmul.f32 0.5, %v104
      %v106 = vsub.f32 1.5, %v105
      %v107 = vmul.f32 %v102, %v106
      %vm108 = vweird.f32 %v101
      %vm109 = vweird.f32 %v102
      %vm110 = vmor %vm108, %vm109
      %v111 = vsel %vm110, %v102, %v107
      %v112 = vmul.f32 %v95, %v111
      %v113 = vld [vmem:[#allocation6] sm:$0xff]
      %v114 = vld [vmem:[#allocation6 + $0x8] sm:$0xff]
      %v115 = vld [vmem:[#allocation6 + $0x10] sm:$0xff]
      %v116 = vld [vmem:[#allocation6 + $0x18] sm:$0xff]
      %v117 = vld [vmem:[%s2] sm:$0x1]
      %v119 = vperm.slane %v117, 0
      %v122 = vsel %vm56, %v112, 0
      %124 = vmatpush.msra.mxu0 0.0
      %125 = vmatpush.msra.mxu0 0.0
      %126 = vmatpush.msra.mxu0 0.0
      %127 = vmatpush.msra.mxu0 0.0
      %128 = vmatpush.msra.mxu0 0.0
      %129 = vmatpush.msra.mxu0 0.0
      %130 = vmatpush.msra.mxu0 0.0
      %131 = vmatpush.msra.mxu0 0.0
      %132 = vmatpush.msra.mxu0 0.0
      %133 = vmatpush.msra.mxu0 0.0
      %134 = vmatpush.msra.mxu0 0.0
      %135 = vmatpush.msra.mxu0 0.0
      %136 = vmatpush.msra.mxu0 %v116
      %137 = vmatpush.msra.mxu0 %v115
      %138 = vmatpush.msra.mxu0 %v114
      %139 = vmatpush.msra.mxu0 %v113
      %140 = vmatmul.f32.gmra.mxu0 %v122
      %v141 = vpop.f32.mrf.mxu0
      %v142 = vadd.f32 %v119, %v141
      %143 = vdwg.mxu0
      %144 = vst [vmem:[#allocation8] sm:$0x3] %v142
    $region29: #{tpu_custom_call.1} parent=1 // pred_fallthru
      _
    // Predicated region
    $region30: #{tpu_custom_call.1} parent=1 // pred_check
      _
    $region31: #{tpu_custom_call.1} parent=1 // pred_check_branch
      %146 = sbr.rel (0) target = $region33
    $region32: #{tpu_custom_call.1} parent=1 // pred_region
      %148 = vsyncadd [#allocation5], 0
      %s150 = sshll.u32 [#allocation8], 4
      %s151 = int_to_ptr.vmem [resolvable:$true] %s150
      %s152 = sshll.u32 %s3, 4
      %s153 = int_to_ptr.hbm [resolvable:$true] %s152
      %155 = dma.vmem_to_hbm [thread:$0]  %s151, 32, %s153, [#allocation5]
    $region33: #{tpu_custom_call.1} parent=1 // pred_fallthru
      _
    // Predicated region
    $region34: #{tpu_custom_call.1} parent=1 // pred_check
      _
    $region35: #{tpu_custom_call.1} parent=1 // pred_check_branch
      %157 = sbr.rel (0) target = $region37
    $region36: #{tpu_custom_call.1} parent=1 // pred_region
      %159 = dma.done [#allocation5], 32
    $region37: #{tpu_custom_call.1} parent=1 // pred_fallthru
      _
    %160 = vsyncpa [#allocation4], 1
    %161 = vsyncpa [#allocation7], 1
    %162 = vsyncpa [#allocation5], 1

</llo_original>
